<compile_context>
chip_gen: v7x
topology: tpu7x:2x2x1
jax: 0.10.0
libtpu: 0.0.40
codegen_flags: <defaults>
</compile_context>

<pallas_src>
import functools
import math

import jax
import jax.numpy as jnp
from jax import lax
from jax.experimental import pallas as pl
from jax.experimental.pallas import tpu as pltpu

# ---------------- small, deterministic config ----------------
BATCH = 2
IMG = 16
C1 = 8             # stage-1 conv channels (per modality)
C2 = 16            # stage-2 conv channels (== all_feats[-2] channels, per modality)
FEAT_DIM = 32      # per-modality feature dim (resnet.out_feats)
DATASET_SIZE = 64  # NCE memory bank rows (output_size)
NCE_K = 4
NCE_T = 0.07
NCE_M = 0.5


# =====================================================================
# Kernel 1+2: conv (as im2col matmul) + bias + relu, fused over modality
# =====================================================================
def _conv_mm_kernel(x_ref, w_ref, b_ref, o_ref):
    # One modality per grid step.  bf16 operands -> MXU, f32 accumulate,
    # f32 epilogue (v5e VPU has no bf16), cast on store.
    acc = jnp.dot(x_ref[0], w_ref[0], preferred_element_type=jnp.float32)
    o_ref[0] = jnp.maximum(acc + b_ref[0], 0.0).astype(o_ref.dtype)


def conv_pair(x_pair, w_pair, b_pair, out_dtype):
    """x_pair: (2, M, K) bf16; w_pair: (2, K, N) bf16; b_pair: (2, 1, N) f32."""
    n_mod, M, K = x_pair.shape
    N = w_pair.shape[-1]
    return pl.pallas_call(
        _conv_mm_kernel,
        out_shape=jax.ShapeDtypeStruct((n_mod, M, N), out_dtype),
        grid=(n_mod,),
        in_specs=[pl.BlockSpec((1, M, K), lambda m: (m, 0, 0)),
                  pl.BlockSpec((1, K, N), lambda m: (m, 0, 0)),
                  pl.BlockSpec((1, 1, N), lambda m: (m, 0, 0))],
        out_specs=pl.BlockSpec((1, M, N), lambda m: (m, 0, 0)),
        compiler_params=pltpu.CompilerParams(
            dimension_semantics=("parallel",)),   # modality axis -> both v7x TCs
    )(x_pair, w_pair, b_pair)


# =====================================================================
# Kernel 3: fused head  (GAP + FC + normalize + concat + NCEAverage)
# =====================================================================
def _head_kernel(idx_ref, y_ref,                               # scalar prefetch (SMEM)
                 f2_ref, wfc_ref, bfc_ref, meml_in, memab_in,  # inputs
                 feats_ref, outlab_ref, meml_out, memab_out,   # outputs
                 wl_buf, wab_buf, upd_buf, gsem, wsem,         # scratch
                 *, T, momentum):
    B, kp1, D = wl_buf.shape
    hw = f2_ref.shape[2]
    c2 = f2_ref.shape[3]
    M = B * kp1

    # ---- 1) kick off exact row-gather DMAs from the HBM-resident banks ----
    # (indices come from SMEM scalar prefetch; replaces the lossy one-hot matmul gather)
    gathers = []
    for m in range(M):
        b, k = divmod(m, kp1)
        row = idx_ref[m]
        cl = pltpu.make_async_copy(meml_in.at[row], wl_buf.at[b, k], gsem.at[0, m])
        ca = pltpu.make_async_copy(memab_in.at[row], wab_buf.at[b, k], gsem.at[1, m])
        cl.start()
        ca.start()
        gathers += [cl, ca]

    # ---- 2) global average pool (as an MXU matmul) + FC + F.normalize ----
    col = lax.broadcasted_iota(jnp.int32, (B, B * hw), 1)
    rowi = lax.broadcasted_iota(jnp.int32, (B, B * hw), 0)
    pool = jnp.where((col >= rowi * hw) & (col < (rowi + 1) * hw),
                     1.0 / hw, 0.0).astype(jnp.float32)        # (B, B*hw)

    norm_feats = []
    for mod in range(2):                                       # 0 = L, 1 = ab
        fm = f2_ref[mod].reshape(B * hw, c2)                   # (B*hw, C2)
        pooled = jnp.dot(pool, fm, preferred_element_type=jnp.float32)       # (B, C2)
        feat = jnp.dot(pooled, wfc_ref[mod],
                       preferred_element_type=jnp.float32) + bfc_ref[mod]    # (B, D)
        # F.normalize default eps = 1e-12
        inv_n = 1.0 / jnp.maximum(
            jnp.sqrt(jnp.sum(feat * feat, axis=1, keepdims=True)), 1e-12)
        norm_feats.append(feat * inv_n)
    nl, nab = norm_feats
    # single lane-dense full-block store for the concatenated features
    feats_ref[...] = jnp.concatenate([nl, nab], axis=1)        # (B, 2D)

    # ---- 3) NCE scores against the gathered memory rows ----
    for c in gathers:
        c.wait()
    w_l = wl_buf[...]                                          # (B, K+1, D)
    w_ab = wab_buf[...]
    inv_t = 1.0 / T
    # out_l = bmm(weight_ab, l)/T ; out_ab = bmm(weight_l, ab)/T   (exact f32 VPU dots)
    out_l = jnp.sum(w_ab * nl[:, None, :], axis=2) * inv_t     # (B, K+1)
    out_ab = jnp.sum(w_l * nab[:, None, :], axis=2) * inv_t
    outlab_ref[...] = jnp.stack([out_l, out_ab], axis=0)       # one store, (2, B, K+1)

    # ---- 4) momentum update of positive rows (idx[:,0] == y) + L2 renorm,
    #         written straight back to the aliased HBM banks (in-place) ----
    one_m = 1.0 - momentum
    l_pos = w_l[:, 0, :] * momentum + nl * one_m               # (B, D)
    ab_pos = w_ab[:, 0, :] * momentum + nab * one_m
    # torch reference: pow(2).sum().pow(0.5) with NO eps -> keep identical.
    upd_buf[0] = l_pos / jnp.sqrt(jnp.sum(l_pos * l_pos, axis=1, keepdims=True))
    upd_buf[1] = ab_pos / jnp.sqrt(jnp.sum(ab_pos * ab_pos, axis=1, keepdims=True))

    writes = []
    for b in range(B):
        r = y_ref[b]
        cl = pltpu.make_async_copy(upd_buf.at[0, b], meml_out.at[r], wsem.at[0, b])
        ca = pltpu.make_async_copy(upd_buf.at[1, b], memab_out.at[r], wsem.at[1, b])
        cl.start()
        ca.start()
        writes += [cl, ca]
    for c in writes:
        c.wait()


def fused_head(f2_pair, wfc_pair, bfc_pair, mem_l, mem_ab, idx_flat, y, T, momentum):
    """f2_pair: (2, B, HW, C2) f32; returns feats, out_lab, new_mem_l, new_mem_ab."""
    _, B, HW, c2 = f2_pair.shape
    D = wfc_pair.shape[-1]
    Kp1 = idx_flat.shape[0] // B
    N = mem_l.shape[0]

    grid_spec = pltpu.PrefetchScalarGridSpec(
        num_scalar_prefetch=2,                 # idx, y -> SMEM
        grid=(1,),
        in_specs=[
            pl.BlockSpec((2, B, HW, c2), lambda i, idx, yy: (0, 0, 0, 0)),
            pl.BlockSpec((2, c2, D), lambda i, idx, yy: (0, 0, 0)),
            pl.BlockSpec((2, 1, D), lambda i, idx, yy: (0, 0, 0)),
            pl.BlockSpec(memory_space=pl.ANY),   # memory_l stays in HBM
            pl.BlockSpec(memory_space=pl.ANY),   # memory_ab stays in HBM
        ],
        out_specs=(
            pl.BlockSpec((B, 2 * D), lambda i, idx, yy: (0, 0)),
            pl.BlockSpec((2, B, Kp1), lambda i, idx, yy: (0, 0, 0)),
            pl.BlockSpec(memory_space=pl.ANY),   # aliased memory_l (in-place rows)
            pl.BlockSpec(memory_space=pl.ANY),   # aliased memory_ab
        ),
        scratch_shapes=[
            pltpu.VMEM((B, Kp1, D), jnp.float32),     # gathered memory_l rows
            pltpu.VMEM((B, Kp1, D), jnp.float32),     # gathered memory_ab rows
            pltpu.VMEM((2, B, D), jnp.float32),       # staged updated rows
            pltpu.SemaphoreType.DMA((2, B * Kp1)),    # gather sems
            pltpu.SemaphoreType.DMA((2, B)),          # writeback sems
        ],
    )

    feats, out_lab, new_mem_l, new_mem_ab = pl.pallas_call(
        functools.partial(_head_kernel, T=T, momentum=momentum),
        out_shape=(
            jax.ShapeDtypeStruct((B, 2 * D), jnp.float32),
            jax.ShapeDtypeStruct((2, B, Kp1), jnp.float32),
            jax.ShapeDtypeStruct((N, D), jnp.float32),
            jax.ShapeDtypeStruct((N, D), jnp.float32),
        ),
        grid_spec=grid_spec,
        # inputs: 0=idx 1=y 2=f2 3=wfc 4=bfc 5=mem_l 6=mem_ab  ->  outputs 2,3
        input_output_aliases={5: 2, 6: 3},
        compiler_params=pltpu.CompilerParams(
            dimension_semantics=("arbitrary",)),
    )(idx_flat, y, f2_pair, wfc_pair, bfc_pair, mem_l, mem_ab)
    return feats, out_lab, new_mem_l, new_mem_ab


# ---------------- glue: im2col, params ----------------
def im2col(x_nhwc, k=3, stride=2, pad=1):
    B, H, W, C = x_nhwc.shape
    xp = jnp.pad(x_nhwc, ((0, 0), (pad, pad), (pad, pad), (0, 0)))
    Ho = (H + 2 * pad - k) // stride + 1
    Wo = (W + 2 * pad - k) // stride + 1
    patches = []
    for dy in range(k):
        for dx in range(k):
            patches.append(xp[:, dy:dy + stride * Ho:stride, dx:dx + stride * Wo:stride, :])
    p = jnp.concatenate(patches, axis=-1)            # (B, Ho, Wo, k*k*C), (dy,dx,c) order
    return p.reshape(B * Ho * Wo, k * k * C), Ho, Wo


def _uniform(key, shape, fan_in):
    bound = 1.0 / math.sqrt(fan_in)
    return jax.random.uniform(key, shape, jnp.float32, -bound, bound)


def init_encoder(key, cin):
    k1, k2, k3, k4, k5, k6 = jax.random.split(key, 6)
    return {
        "w1": _uniform(k1, (3 * 3 * cin, C1), 3 * 3 * cin),
        "b1": _uniform(k2, (C1,), 3 * 3 * cin),
        "w2": _uniform(k3, (3 * 3 * C1, C2), 3 * 3 * C1),
        "b2": _uniform(k4, (C2,), 3 * 3 * C1),
        "wfc": _uniform(k5, (C2, FEAT_DIM), C2),
        "bfc": _uniform(k6, (FEAT_DIM,), C2),
    }


def init_params(key):
    kl, kab, kml, kmab = jax.random.split(key, 4)
    stdv = 1.0 / math.sqrt(FEAT_DIM / 3)    # NCEAverage memory init
    return {
        "resnet_l": init_encoder(kl, 1),
        "resnet_ab": init_encoder(kab, 2),
        "memory_l": jax.random.uniform(kml, (DATASET_SIZE, FEAT_DIM), jnp.float32, -stdv, stdv),
        "memory_ab": jax.random.uniform(kmab, (DATASET_SIZE, FEAT_DIM), jnp.float32, -stdv, stdv),
    }


def _stacked_conv_params(params):
    rl, rab = params["resnet_l"], params["resnet_ab"]
    # stage-1: pad L's single input channel to match ab's 2 channels (padded input is 0)
    w1_l = jnp.pad(rl["w1"].reshape(9, 1, C1), ((0, 0), (0, 1), (0, 0))).reshape(18, C1)
    w1_pair = jnp.stack([w1_l, rab["w1"]], axis=0).astype(jnp.bfloat16)       # (2, 18, C1)
    b1_pair = jnp.stack([rl["b1"], rab["b1"]], axis=0).reshape(2, 1, C1)
    w2_pair = jnp.stack([rl["w2"], rab["w2"]], axis=0).astype(jnp.bfloat16)   # (2, 72, C2)
    b2_pair = jnp.stack([rl["b2"], rab["b2"]], axis=0).reshape(2, 1, C2)
    wfc_pair = jnp.stack([rl["wfc"], rab["wfc"]], axis=0)                      # (2, C2, D)
    bfc_pair = jnp.stack([rl["bfc"], rab["bfc"]], axis=0).reshape(2, 1, FEAT_DIM)
    return w1_pair, b1_pair, w2_pair, b2_pair, wfc_pair, bfc_pair


def cmc_forward(params, x_nchw, y, neg_key):
    """x_nchw: (B, 3, H, W); y: (B,) instance indices (the `idx` arg of CMCModel.forward)."""
    B, _, H, W = x_nchw.shape
    y = y.astype(jnp.int32)

    w1_pair, b1_pair, w2_pair, b2_pair, wfc_pair, bfc_pair = _stacked_conv_params(params)

    # split modalities, NHWC, pad L channel 1->2 so both modalities share one conv call
    l = jnp.transpose(x_nchw[:, :1], (0, 2, 3, 1))                     # (B,H,W,1)
    ab = jnp.transpose(x_nchw[:, 1:3], (0, 2, 3, 1))                   # (B,H,W,2)
    l2 = jnp.pad(l, ((0, 0), (0, 0), (0, 0), (0, 1)))                  # (B,H,W,2)
    x_pair = jnp.stack([l2, ab], axis=0)                               # (2,B,H,W,2)

    # stage 1 (both modalities in one pallas_call, grid=(2,) parallel)
    p1, h1, w1o = im2col(x_pair.reshape(2 * B, H, W, 2))
    p1 = p1.reshape(2, B * h1 * w1o, -1).astype(jnp.bfloat16)
    f1_pair = conv_pair(p1, w1_pair, b1_pair, out_dtype=jnp.bfloat16)  # (2, B*h1*w1, C1)

    # stage 2
    p2, h2, w2o = im2col(f1_pair.reshape(2 * B, h1, w1o, C1))
    p2 = p2.reshape(2, B * h2 * w2o, -1)                               # bf16 already
    f2_pair = conv_pair(p2, w2_pair, b2_pair, out_dtype=jnp.float32)   # (2, B*h2*w2, C2)

    # dense_feats = cat(all_feats_l[-2], all_feats_ab[-2], dim=1) in NCHW (layout only)
    f2_img = f2_pair.reshape(2, B, h2, w2o, C2)
    dense_feats = jnp.transpose(f2_img, (1, 0, 4, 2, 3)).reshape(B, 2 * C2, h2, w2o)

    # NCE negative sampling (idx[:, 0] = y)
    idx_full = jax.random.randint(neg_key, (B, NCE_K + 1), 0, DATASET_SIZE, dtype=jnp.int32)
    idx_full = idx_full.at[:, 0].set(y)

    feats, out_lab, new_mem_l, new_mem_ab = fused_head(
        f2_img.reshape(2, B, h2 * w2o, C2), wfc_pair, bfc_pair,
        params["memory_l"], params["memory_ab"],
        idx_full.reshape(-1), y, NCE_T, NCE_M)

    out_l = out_lab[0].reshape(B, NCE_K + 1, 1)
    out_ab = out_lab[1].reshape(B, NCE_K + 1, 1)
    return feats, dense_feats, (out_l, out_ab), new_mem_l, new_mem_ab


if __name__ == "__main__":
    key = jax.random.PRNGKey(0)
    kx, ky, kp, kneg = jax.random.split(key, 4)

    x = jax.random.normal(kx, (BATCH, 3, IMG, IMG), dtype=jnp.float32)
    y = jax.random.randint(ky, (BATCH,), 0, DATASET_SIZE, dtype=jnp.int32)
    params = init_params(kp)

    feats, dense_feats, (out_l, out_ab), new_mem_l, new_mem_ab = cmc_forward(params, x, y, kneg)
    jax.block_until_ready((feats, dense_feats, out_l, out_ab, new_mem_l, new_mem_ab))

    assert feats.shape == (BATCH, 2 * FEAT_DIM)
    assert dense_feats.shape == (BATCH, 2 * C2, 4, 4)
    assert out_l.shape == (BATCH, NCE_K + 1, 1)
    assert out_ab.shape == (BATCH, NCE_K + 1, 1)
    assert new_mem_l.shape == (DATASET_SIZE, FEAT_DIM)
    assert new_mem_ab.shape == (DATASET_SIZE, FEAT_DIM)
    assert bool(jnp.isfinite(feats).all())
    assert bool(jnp.isfinite(out_l).all()) and bool(jnp.isfinite(out_ab).all())
    assert bool(jnp.isfinite(new_mem_l).all())

    print("KERNEL_OK")
</pallas_src>

<mosaic_0001>
module attributes {stable_mosaic.version = 11 : i64} {
  func.func @_conv_mm_kernel(%arg0: i32, %arg1: memref<1x128x18xbf16, #tpu.memory_space<vmem>>, %arg2: memref<1x18x8xbf16, #tpu.memory_space<vmem>>, %arg3: memref<1x1x8xf32, #tpu.memory_space<vmem>>, %arg4: memref<1x128x8xbf16, #tpu.memory_space<vmem>>) attributes {dimension_semantics = [#tpu.dimension_semantics<parallel>], iteration_bounds = array<i64: 2>, scalar_prefetch = 0 : i64, scratch_operands = 0 : i64, tpu.core_type = #tpu.core_type<tc>, window_params = [{transform_indices = @transform_0, window_bounds = array<i64: 1, 128, 18>}, {transform_indices = @transform_1, window_bounds = array<i64: 1, 18, 8>}, {transform_indices = @transform_2, window_bounds = array<i64: 1, 1, 8>}, {transform_indices = @transform_3, window_bounds = array<i64: 1, 128, 8>}]} {
    %c0 = arith.constant 0 : index
    %c0_0 = arith.constant 0 : index
    %c0_1 = arith.constant 0 : index
    %0 = vector.load %arg1[%c0, %c0_0, %c0_1] : memref<1x128x18xbf16, #tpu.memory_space<vmem>>, vector<1x128x18xbf16>
    %1 = vector.shape_cast %0 : vector<1x128x18xbf16> to vector<128x18xbf16>
    %c0_2 = arith.constant 0 : index
    %c0_3 = arith.constant 0 : index
    %c0_4 = arith.constant 0 : index
    %2 = vector.load %arg2[%c0_2, %c0_3, %c0_4] : memref<1x18x8xbf16, #tpu.memory_space<vmem>>, vector<1x18x8xbf16>
    %3 = vector.shape_cast %2 : vector<1x18x8xbf16> to vector<18x8xbf16>
    %cst = arith.constant dense<0.000000e+00> : vector<128x8xf32>
    %4 = tpu.matmul %1, %3, %cst {dimension_numbers = #tpu.dot_dimension_numbers<[1], [0], [0], [1], [0, 0, 1, 1], [], []>} : vector<128x18xbf16>, vector<18x8xbf16>, vector<128x8xf32> -> vector<128x8xf32>
    %c0_5 = arith.constant 0 : index
    %c0_6 = arith.constant 0 : index
    %c0_7 = arith.constant 0 : index
    %5 = vector.load %arg3[%c0_5, %c0_6, %c0_7] : memref<1x1x8xf32, #tpu.memory_space<vmem>>, vector<1x1x8xf32>
    %6 = vector.shape_cast %5 : vector<1x1x8xf32> to vector<1x8xf32>
    %7 = vector.broadcast %6 : vector<1x8xf32> to vector<128x8xf32>
    %8 = arith.addf %4, %7 : vector<128x8xf32>
    %cst_8 = arith.constant 0.000000e+00 : f32
    %9 = vector.broadcast %cst_8 : f32 to vector<128x8xf32>
    %10 = arith.maximumf %8, %9 : vector<128x8xf32>
    %11 = arith.truncf %10 : vector<128x8xf32> to vector<128x8xbf16>
    %c0_9 = arith.constant 0 : index
    %c0_10 = arith.constant 0 : index
    %c0_11 = arith.constant 0 : index
    %12 = vector.load %arg4[%c0_9, %c0_10, %c0_11] : memref<1x128x8xbf16, #tpu.memory_space<vmem>>, vector<1x128x8xbf16>
    %13 = vector.shape_cast %12 : vector<1x128x8xbf16> to vector<128x8xbf16>
    %14 = vector.shape_cast %11 : vector<128x8xbf16> to vector<1x128x8xbf16>
    tpu.vector_store %arg4[%c0_9, %c0_10, %c0_11], %14 {strides = array<i32>} : memref<1x128x8xbf16, #tpu.memory_space<vmem>>, vector<1x128x8xbf16>,
    return
  }
  func.func @transform_0(%arg0: i32) -> (i32, i32, i32) {
    %c0_i32 = arith.constant 0 : i32
    %c0_i32_0 = arith.constant 0 : i32
    %c0_i32_1 = arith.constant 0 : i32
    return %arg0, %c0_i32, %c0_i32_0 : i32, i32, i32
  }
  func.func @transform_1(%arg0: i32) -> (i32, i32, i32) {
    %c0_i32 = arith.constant 0 : i32
    %c0_i32_0 = arith.constant 0 : i32
    %c0_i32_1 = arith.constant 0 : i32
    return %arg0, %c0_i32, %c0_i32_0 : i32, i32, i32
  }
  func.func @transform_2(%arg0: i32) -> (i32, i32, i32) {
    %c0_i32 = arith.constant 0 : i32
    %c0_i32_0 = arith.constant 0 : i32
    %c0_i32_1 = arith.constant 0 : i32
    return %arg0, %c0_i32, %c0_i32_0 : i32, i32, i32
  }
  func.func @transform_3(%arg0: i32) -> (i32, i32, i32) {
    %c0_i32 = arith.constant 0 : i32
    %c0_i32_0 = arith.constant 0 : i32
    %c0_i32_1 = arith.constant 0 : i32
    return %arg0, %c0_i32, %c0_i32_0 : i32, i32, i32
  }
}

</mosaic_0001>

<llo_original>
// kernel: tpu_custom_call.1
$region0: #{tpu_custom_call.1}
  #allocation0 [shape = 'u32[]', space=smem, size = 0x4, offset = 0x4, fixed_abs, tag = 'smem constant byte address 0x4 - core index']
  #allocation1 [shape = 'u32[144,128]{1,0:T(1,128)}', space=vmem, size = 0x12000, scoped, tag = 'internal scratch']
  %s0 = inlined_call_operand.vmem [shape: bf16[2,128,18], index: 0, kind: input, shape index: {}]
  %s1 = inlined_call_operand.vmem [shape: bf16[2,18,8], index: 1, kind: input, shape index: {}]
  %s2 = inlined_call_operand.vmem [shape: f32[2,1,8], index: 2, kind: input, shape index: {}]
  %s3 = inlined_call_operand.vmem [shape: bf16[2,128,8], index: 3, kind: output, shape index: {}]
  %s4 = sld [smem:[#allocation0]]
  $region45: #{tpu_custom_call.1} parent=0
    _
  %s6 = ssub.s32 1, %s4
  %s7 = scalar_select 0, %s6, %s4
  loop: start=0, step=1, limit=4
  $region2: #{tpu_custom_call.1} parent=0 // loop_pre_header
    _
  $region3: #{tpu_custom_call.1} parent=0 // loop_header
    %s9 = sphi 0, %s13
    %p10 = scmp.ge.s32.totalorder %s9, 4
    %s19 = sphi 0, %s21
    %s22 = sphi 0, %s19
    %s23 = sphi 0, %s22
    %s39 = sphi 0, %s23
    %s45 = sphi 0, %s47
    %s48 = sphi 0, %s45
    %s49 = sphi 0, %s48
    %s65 = sphi 0, %s49
    %s71 = sphi 0, %s73
    %s74 = sphi 0, %s71
    %s75 = sphi 0, %s74
    %s91 = sphi 0, %s75
    %s97 = sphi 0, %s99
    %s100 = sphi 0, %s97
    %s101 = sphi 0, %s100
    %s117 = sphi 0, %s101
  $region4: #{tpu_custom_call.1} parent=0 // loop_header_branch
    %12 = sbr.rel (%p10) target = $region8
  $region5: #{tpu_custom_call.1} parent=0 // loop_body
    %s14 = ssub.s32 %s9, 1
    %s15 = ssub.s32 %s9, 2
    %s16 = sadd.s32 %s9, 1
    %s17 = ssub.s32 %s9, %s16
    %p18 = scmp.eq.s32.totalorder %s17, 0
    %s20 = sadd.s32 %s19, 1
    %s21 = scalar_select %p18, %s19, %s20
    %p24 = pneg %p18
    %p25 = scmp.eq.s32.totalorder %s9, 1
    %p26 = por %p24, %p25
    %p27 = scmp.ne.s32.totalorder %s19, %s22
    %p28 = scmp.eq.s32.totalorder %s9, 0
    %p29 = por %p27, %p28
    %p30 = scmp.ne.s32.totalorder %s19, %s22
    %p31 = scmp.eq.s32.totalorder %s14, 1
    %p32 = por %p30, %p31
    %p33 = scmp.ne.s32.totalorder %s22, %s23
    %p34 = scmp.eq.s32.totalorder %s14, 0
    %p35 = por %p33, %p34
    %p36 = scmp.ne.s32.totalorder %s22, %s23
    %p37 = scmp.eq.s32.totalorder %s15, 1
    %p38 = por %p36, %p37
    %p40 = scmp.ne.s32.totalorder %s23, %s39
    %p41 = scmp.eq.s32.totalorder %s15, 0
    %p42 = por %p40, %p41
    %s43 = ssub.s32 %s9, %s16
    %p44 = scmp.eq.s32.totalorder %s43, 0
    %s46 = sadd.s32 %s45, 1
    %s47 = scalar_select %p44, %s45, %s46
    %p50 = pneg %p44
    %p51 = scmp.eq.s32.totalorder %s9, 1
    %p52 = por %p50, %p51
    %p53 = scmp.ne.s32.totalorder %s45, %s48
    %p54 = scmp.eq.s32.totalorder %s9, 0
    %p55 = por %p53, %p54
    %p56 = scmp.ne.s32.totalorder %s45, %s48
    %p57 = scmp.eq.s32.totalorder %s14, 1
    %p58 = por %p56, %p57
    %p59 = scmp.ne.s32.totalorder %s48, %s49
    %p60 = scmp.eq.s32.totalorder %s14, 0
    %p61 = por %p59, %p60
    %p62 = scmp.ne.s32.totalorder %s48, %s49
    %p63 = scmp.eq.s32.totalorder %s15, 1
    %p64 = por %p62, %p63
    %p66 = scmp.ne.s32.totalorder %s49, %s65
    %p67 = scmp.eq.s32.totalorder %s15, 0
    %p68 = por %p66, %p67
    %s69 = ssub.s32 %s9, %s16
    %p70 = scmp.eq.s32.totalorder %s69, 0
    %s72 = sadd.s32 %s71, 1
    %s73 = scalar_select %p70, %s71, %s72
    %p76 = pneg %p70
    %p77 = scmp.eq.s32.totalorder %s9, 1
    %p78 = por %p76, %p77
    %p79 = scmp.ne.s32.totalorder %s71, %s74
    %p80 = scmp.eq.s32.totalorder %s9, 0
    %p81 = por %p79, %p80
    %p82 = scmp.ne.s32.totalorder %s71, %s74
    %p83 = scmp.eq.s32.totalorder %s14, 1
    %p84 = por %p82, %p83
    %p85 = scmp.ne.s32.totalorder %s74, %s75
    %p86 = scmp.eq.s32.totalorder %s14, 0
    %p87 = por %p85, %p86
    %p88 = scmp.ne.s32.totalorder %s74, %s75
    %p89 = scmp.eq.s32.totalorder %s15, 1
    %p90 = por %p88, %p89
    %p92 = scmp.ne.s32.totalorder %s75, %s91
    %p93 = scmp.eq.s32.totalorder %s15, 0
    %p94 = por %p92, %p93
    %s95 = ssub.s32 %s9, %s16
    %p96 = scmp.eq.s32.totalorder %s95, 0
    %s98 = sadd.s32 %s97, 1
    %s99 = scalar_select %p96, %s97, %s98
    %p102 = pneg %p96
    %p103 = scmp.eq.s32.totalorder %s9, 1
    %p104 = por %p102, %p103
    %p105 = scmp.ne.s32.totalorder %s97, %s100
    %p106 = scmp.eq.s32.totalorder %s9, 0
    %p107 = por %p105, %p106
    %p108 = scmp.ne.s32.totalorder %s97, %s100
    %p109 = scmp.eq.s32.totalorder %s14, 1
    %p110 = por %p108, %p109
    %p111 = scmp.ne.s32.totalorder %s100, %s101
    %p112 = scmp.eq.s32.totalorder %s14, 0
    %p113 = por %p111, %p112
    %p114 = scmp.ne.s32.totalorder %s100, %s101
    %p115 = scmp.eq.s32.totalorder %s15, 1
    %p116 = por %p114, %p115
    %p118 = scmp.ne.s32.totalorder %s101, %s117
    %p119 = scmp.eq.s32.totalorder %s15, 0
    %p120 = por %p118, %p119
    %p121 = scmp.le.s32.totalorder 1, %s9
    %p122 = scmp.lt.s32.totalorder %s9, 3
    %p123 = pnand %p121, %p122
    %p124 = pneg %p123
    // Predicated region
    $region9: #{tpu_custom_call.1} parent=5 // pred_check
      _
    $region10: #{tpu_custom_call.1} parent=5 // pred_check_branch
      %126 = sbr.rel (%p123) target = $region12
    $region11: #{tpu_custom_call.1} parent=5 // pred_region
      %s127 = ssub.s32 %s9, 1
    $region12: #{tpu_custom_call.1} parent=5 // pred_fallthru
      _
    %p128 = scmp.lt.s32.totalorder %s9, 2
    // Predicated region
    $region13: #{tpu_custom_call.1} parent=5 // pred_check
      %p129 = pneg %p128
    $region14: #{tpu_custom_call.1} parent=5 // pred_check_branch
      %131 = sbr.rel (%p129) target = $region16
    $region15: #{tpu_custom_call.1} parent=5 // pred_region
      // Predicated region
      $region17: #{tpu_custom_call.1} parent=15 // pred_check
        %p132 = pneg %p29
      $region18: #{tpu_custom_call.1} parent=15 // pred_check_branch
        %134 = sbr.rel (%p132) target = $region20
      $region19: #{tpu_custom_call.1} parent=15 // pred_region
        %p135 = scmp.lt.s32.totalorder %s9, 1
        %s136 = scalar_select %p135, %s9, 1
        %s137 = smul.addr %s136, 16
        %s138 = smul.addr %s137, 4
        %s139 = scalar_lea.vmem %s0, %s138
      $region20: #{tpu_custom_call.1} parent=15 // pred_fallthru
        _
      // Predicated region
      $region21: #{tpu_custom_call.1} parent=15 // pred_check
        %p140 = pneg %p55
      $region22: #{tpu_custom_call.1} parent=15 // pred_check_branch
        %142 = sbr.rel (%p140) target = $region24
      $region23: #{tpu_custom_call.1} parent=15 // pred_region
        %p143 = scmp.lt.s32.totalorder %s9, 1
        %s144 = scalar_select %p143, %s9, 1
        %s145 = smul.addr %s144, 3
        %s146 = smul.addr %s145, 4
        %s147 = scalar_lea.vmem %s1, %s146
      $region24: #{tpu_custom_call.1} parent=15 // pred_fallthru
        _
      // Predicated region
      $region25: #{tpu_custom_call.1} parent=15 // pred_check
        %p148 = pneg %p81
      $region26: #{tpu_custom_call.1} parent=15 // pred_check_branch
        %150 = sbr.rel (%p148) target = $region28
      $region27: #{tpu_custom_call.1} parent=15 // pred_region
        %p151 = scmp.lt.s32.totalorder %s9, 1
        %s152 = scalar_select %p151, %s9, 1
        %s153 = scalar_lea.vmem %s2, %s152
      $region28: #{tpu_custom_call.1} parent=15 // pred_fallthru
        _
    $region16: #{tpu_custom_call.1} parent=5 // pred_fallthru
      _
    %p154 = scmp.le.s32.totalorder 1, %s9
    %p155 = scmp.lt.s32.totalorder %s9, 3
    %p156 = pnand %p154, %p155
    %p157 = pneg %p156
    // Predicated region
    $region29: #{tpu_custom_call.1} parent=5 // pred_check
      _
    $region30: #{tpu_custom_call.1} parent=5 // pred_check_branch
      %159 = sbr.rel (%p156) target = $region32
    $region31: #{tpu_custom_call.1} parent=5 // pred_region
      %s160 = ssub.s32 %s9, 1
      %p161 = scmp.lt.s32.totalorder %s14, 1
      %s162 = scalar_select %p161, %s14, 1
      %s163 = smul.addr %s162, 16
      %s164 = smul.addr %s163, 4
      %s165 = scalar_lea.vmem %s0, %s164
      %p166 = pneg %p35
      %p167 = pneg %p32
      %p168 = scmp.lt.s32.totalorder %s14, 1
      %s169 = scalar_select %p168, %s14, 1
      %s170 = smul.addr %s169, 3
      %s171 = smul.addr %s170, 4
      %s172 = scalar_lea.vmem %s1, %s171
      %p173 = pneg %p61
      %p174 = pneg %p58
      %p175 = scmp.lt.s32.totalorder %s14, 1
      %s176 = scalar_select %p175, %s14, 1
      %s177 = scalar_lea.vmem %s2, %s176
      %p178 = pneg %p87
      %p179 = pneg %p84
      %p180 = pneg %p113
      %p181 = pneg %p110
      %p182 = scmp.lt.s32.totalorder %s14, 1
      %s183 = scalar_select %p182, %s14, 1
      %s184 = smul.addr %s183, 16
      %s185 = smul.addr %s184, 4
      %s186 = scalar_lea.vmem %s3, %s185
      %p187 = scmp.lt.s32.totalorder %s14, 1
      %s188 = scalar_select %p187, %s14, 1
      %s189 = smul.addr %s188, 16
      %s190 = smul.addr %s189, 4
      %s191 = scalar_lea.vmem %s0, %s190
      %p192 = scmp.lt.s32.totalorder %s14, 1
      %s193 = scalar_select %p192, %s14, 1
      %s194 = smul.addr %s193, 3
      %s195 = smul.addr %s194, 4
      %s196 = scalar_lea.vmem %s1, %s195
      %p197 = scmp.lt.s32.totalorder %s14, 1
      %s198 = scalar_select %p197, %s14, 1
      %s199 = scalar_lea.vmem %s2, %s198
      %p200 = scmp.lt.s32.totalorder %s14, 1
      %s201 = scalar_select %p200, %s14, 1
      %s202 = smul.addr %s201, 16
      %s203 = smul.addr %s202, 4
      %s204 = scalar_lea.vmem %s3, %s203
      %v206 = vld [vmem:[%s191] sm:$0xf]
      %v207 = vld [vmem:[%s191 + $0x4] sm:$0xf]
      %v208 = vld [vmem:[%s191 + $0x8] sm:$0xf]
      %v209 = vld [vmem:[%s191 + $0xc] sm:$0xf]
      %v210 = vld [vmem:[%s191 + $0x10] sm:$0xf]
      %v211 = vld [vmem:[%s191 + $0x14] sm:$0xf]
      %v212 = vld [vmem:[%s191 + $0x18] sm:$0xf]
      %v213 = vld [vmem:[%s191 + $0x1c] sm:$0xf]
      %v214 = vld [vmem:[%s191 + $0x20] sm:$0xf]
      %v215 = vld [vmem:[%s191 + $0x24] sm:$0xf]
      %v216 = vld [vmem:[%s191 + $0x28] sm:$0xf]
      %v217 = vld [vmem:[%s191 + $0x2c] sm:$0xf]
      %v218 = vld [vmem:[%s191 + $0x30] sm:$0xf]
      %v219 = vld [vmem:[%s191 + $0x34] sm:$0xf]
      %v220 = vld [vmem:[%s191 + $0x38] sm:$0xf]
      %v221 = vld [vmem:[%s191 + $0x3c] sm:$0xf]
      %v222 = vld [vmem:[%s196] sm:$0xf]
      %v223 = vld [vmem:[%s196 + $0x4] sm:$0xf]
      %v224 = vld [vmem:[%s196 + $0x8] sm:$0x1]
      %v225 = vld [vmem:[%s199] sm:$0x1]
      %v227 = vlaneseq
      %v228 = vshrl.u32 %v227, 7
      %v229 = vsub.s32 0, %v228
      %v230 = vrot.slane %v225, %v229
      %v248 = vunpack.c.l.b16 %v206
      %v249 = vunpack.c.l.b16 %v207
      %v250 = vunpack.c.l.b16 %v208
      %v251 = vunpack.c.l.b16 %v209
      %v252 = vunpack.c.l.b16 %v210
      %v253 = vunpack.c.l.b16 %v211
      %v254 = vunpack.c.l.b16 %v212
      %v255 = vunpack.c.l.b16 %v213
      %v256 = vunpack.c.l.b16 %v214
      %v257 = vunpack.c.l.b16 %v215
      %v258 = vunpack.c.l.b16 %v216
      %v259 = vunpack.c.l.b16 %v217
      %v260 = vunpack.c.l.b16 %v218
      %v261 = vunpack.c.l.b16 %v219
      %v262 = vunpack.c.l.b16 %v220
      %v263 = vunpack.c.l.b16 %v221
      %v264 = vpack.c.b16 %v249, %v248
      %v265 = vpack.c.b16 %v251, %v250
      %v266 = vpack.c.b16 %v253, %v252
      %v267 = vpack.c.b16 %v255, %v254
      %v268 = vpack.c.b16 %v257, %v256
      %v269 = vpack.c.b16 %v259, %v258
      %v270 = vpack.c.b16 %v261, %v260
      %v271 = vpack.c.b16 %v263, %v262
      %v275 = vunpack.c.l.b16 %v222
      %v276 = vunpack.c.l.b16 %v223
      %v277 = vunpack.c.l.b16 %v224
      %v278 = vpack.c.b16 %v276, %v275
      %v279 = vpack.c.b16 %v277, %v277
      %vm281 = vcmask 146432
      %v283 = vsel %vm281, %v264, 0
      %v286 = vsel %vm281, %v265, 0
      %v289 = vsel %vm281, %v266, 0
      %v292 = vsel %vm281, %v267, 0
      %v295 = vsel %vm281, %v268, 0
      %v298 = vsel %vm281, %v269, 0
      %v301 = vsel %vm281, %v270, 0
      %v304 = vsel %vm281, %v271, 0
      %vm306 = vcmask 1040384
      %v308 = vsel %vm306, %v279, 0
      %310 = vmatprep.subr.bf16.mxu0 0
      %311 = vmatpush1.bf16.msra.mxu0 %v278
      %312 = vmatprep.subr.bf16.mxu0 0
      %313 = vmatpush1.bf16.msra.mxu0 %v308
      %314 = vmatprep.subr.bf16.mxu0 0
      %315 = vmatpush1.bf16.msra.mxu0 0
      %316 = vmatprep.subr.bf16.mxu0 0
      %317 = vmatpush1.bf16.msra.mxu0 0
      %318 = vmatprep.subr.bf16.mxu0 0
      %319 = vmatpush1.bf16.msra.mxu0 0
      %320 = vmatprep.subr.bf16.mxu0 0
      %321 = vmatpush1.bf16.msra.mxu0 0
      %322 = vmatprep.subr.bf16.mxu0 0
      %323 = vmatpush1.bf16.msra.mxu0 0
      %324 = vmatprep.subr.bf16.mxu0 0
      %325 = vmatpush1.bf16.msra.mxu0 0
      %326 = vmatprep.subr.bf16.mxu0 0
      %327 = vmatpush1.bf16.msra.mxu0 0
      %328 = vmatprep.subr.bf16.mxu0 0
      %329 = vmatpush1.bf16.msra.mxu0 0
      %330 = vmatprep.subr.bf16.mxu0 0
      %331 = vmatpush1.bf16.msra.mxu0 0
      %332 = vmatprep.subr.bf16.mxu0 0
      %333 = vmatpush1.bf16.msra.mxu0 0
      %334 = vmatprep.subr.bf16.mxu0 0
      %335 = vmatpush1.bf16.msra.mxu0 0
      %336 = vmatprep.subr.bf16.mxu0 0
      %337 = vmatpush1.bf16.msra.mxu0 0
      %338 = vmatprep.subr.bf16.mxu0 0
      %339 = vmatpush1.bf16.msra.mxu0 0
      %340 = vmatprep.subr.bf16.mxu0 0
      %341 = vmatpush1.bf16.msra.mxu0 0
      %342 = vmatprep.mubr.bf16.mxu0 0
      %343 = vmatmul.mubr.bf16.gmra.mrb[0].mxu0 %v283
      %v344 = vpop.f32.mrb[0].mxu0
      %v345 = vadd.f32 %v230, %v344
      %v346 = vpop.f32.mrb[0].mxu0
      %v347 = vpop.f32.mrb[0].mxu0
      %v348 = vadd.f32 %v230, %v347
      %v349 = vpop.f32.mrb[0].mxu0
      %350 = vmatprep.mubr.bf16.mxu0 0
      %351 = vmatmul.mubr.bf16.gmra.mrb[0].mxu0 %v286
      %v352 = vpop.f32.mrb[0].mxu0
      %v353 = vadd.f32 %v230, %v352
      %v354 = vpop.f32.mrb[0].mxu0
      %v355 = vpop.f32.mrb[0].mxu0
      %v356 = vadd.f32 %v230, %v355
      %v357 = vpop.f32.mrb[0].mxu0
      %358 = vmatprep.mubr.bf16.mxu0 0
      %359 = vmatmul.mubr.bf16.gmra.mrb[0].mxu0 %v289
      %v360 = vpop.f32.mrb[0].mxu0
      %v361 = vadd.f32 %v230, %v360
      %v362 = vpop.f32.mrb[0].mxu0
      %v363 = vpop.f32.mrb[0].mxu0
      %v364 = vadd.f32 %v230, %v363
      %v365 = vpop.f32.mrb[0].mxu0
      %366 = vmatprep.mubr.bf16.mxu0 0
      %367 = vmatmul.mubr.bf16.gmra.mrb[0].mxu0 %v292
      %v368 = vpop.f32.mrb[0].mxu0
      %v369 = vadd.f32 %v230, %v368
      %v370 = vpop.f32.mrb[0].mxu0
      %v371 = vpop.f32.mrb[0].mxu0
      %v372 = vadd.f32 %v230, %v371
      %v373 = vpop.f32.mrb[0].mxu0
      %374 = vmatprep.mubr.bf16.mxu0 0
      %375 = vmatmul.mubr.bf16.gmra.mrb[0].mxu0 %v295
      %v376 = vpop.f32.mrb[0].mxu0
      %v377 = vadd.f32 %v230, %v376
      %v378 = vpop.f32.mrb[0].mxu0
      %v379 = vpop.f32.mrb[0].mxu0
      %v380 = vadd.f32 %v230, %v379
      %v381 = vpop.f32.mrb[0].mxu0
      %382 = vmatprep.mubr.bf16.mxu0 0
      %383 = vmatmul.mubr.bf16.gmra.mrb[0].mxu0 %v298
      %v384 = vpop.f32.mrb[0].mxu0
      %v385 = vadd.f32 %v230, %v384
      %v386 = vpop.f32.mrb[0].mxu0
      %v387 = vpop.f32.mrb[0].mxu0
      %v388 = vadd.f32 %v230, %v387
      %v389 = vpop.f32.mrb[0].mxu0
      %390 = vmatprep.mubr.bf16.mxu0 0
      %391 = vmatmul.mubr.bf16.gmra.mrb[0].mxu0 %v301
      %v392 = vpop.f32.mrb[0].mxu0
      %v393 = vadd.f32 %v230, %v392
      %v394 = vpop.f32.mrb[0].mxu0
      %v395 = vpop.f32.mrb[0].mxu0
      %v396 = vadd.f32 %v230, %v395
      %v397 = vpop.f32.mrb[0].mxu0
      %398 = vmatprep.mubr.bf16.mxu0 0
      %399 = vmatmul.mubr.bf16.gmra.mrb[0].mxu0 %v304
      %v400 = vpop.f32.mrb[0].mxu0
      %v401 = vadd.f32 %v230, %v400
      %v402 = vpop.f32.mrb[0].mxu0
      %v403 = vpop.f32.mrb[0].mxu0
      %v404 = vadd.f32 %v230, %v403
      %v405 = vpop.f32.mrb[0].mxu0
      %406 = vdwg.mxu0
      %v407 = vmax.f32 %v345, 0.0
      %v408 = vmax.f32 %v348, 0.0
      %v409 = vmax.f32 %v353, 0.0
      %v410 = vmax.f32 %v356, 0.0
      %v411 = vmax.f32 %v361, 0.0
      %v412 = vmax.f32 %v364, 0.0
      %v413 = vmax.f32 %v369, 0.0
      %v414 = vmax.f32 %v372, 0.0
      %v415 = vmax.f32 %v377, 0.0
      %v416 = vmax.f32 %v380, 0.0
      %v417 = vmax.f32 %v385, 0.0
      %v418 = vmax.f32 %v388, 0.0
      %v419 = vmax.f32 %v393, 0.0
      %v420 = vmax.f32 %v396, 0.0
      %v421 = vmax.f32 %v401, 0.0
      %v422 = vmax.f32 %v404, 0.0
      %v423 = vpack.c.bf16 %v408, %v407
      %v424 = vpack.c.bf16 %v410, %v409
      %v425 = vpack.c.bf16 %v412, %v411
      %v426 = vpack.c.bf16 %v414, %v413
      %v427 = vpack.c.bf16 %v416, %v415
      %v428 = vpack.c.bf16 %v418, %v417
      %v429 = vpack.c.bf16 %v420, %v419
      %v430 = vpack.c.bf16 %v422, %v421
      %v439 = vunpack.c.l.b16 %v423
      %v440 = vunpack.c.h.b16 %v423
      %v441 = vunpack.c.l.b16 %v424
      %v442 = vunpack.c.h.b16 %v424
      %v443 = vunpack.c.l.b16 %v425
      %v444 = vunpack.c.h.b16 %v425
      %v445 = vunpack.c.l.b16 %v426
      %v446 = vunpack.c.h.b16 %v426
      %v447 = vunpack.c.l.b16 %v427
      %v448 = vunpack.c.h.b16 %v427
      %v449 = vunpack.c.l.b16 %v428
      %v450 = vunpack.c.h.b16 %v428
      %v451 = vunpack.c.l.b16 %v429
      %v452 = vunpack.c.h.b16 %v429
      %v453 = vunpack.c.l.b16 %v430
      %v454 = vunpack.c.h.b16 %v430
      %v455 = vpack.c.b16 %v439, %v439
      %v456 = vpack.c.b16 %v440, %v440
      %v457 = vpack.c.b16 %v441, %v441
      %v458 = vpack.c.b16 %v442, %v442
      %v459 = vpack.c.b16 %v443, %v443
      %v460 = vpack.c.b16 %v444, %v444
      %v461 = vpack.c.b16 %v445, %v445
      %v462 = vpack.c.b16 %v446, %v446
      %v463 = vpack.c.b16 %v447, %v447
      %v464 = vpack.c.b16 %v448, %v448
      %v465 = vpack.c.b16 %v449, %v449
      %v466 = vpack.c.b16 %v450, %v450
      %v467 = vpack.c.b16 %v451, %v451
      %v468 = vpack.c.b16 %v452, %v452
      %v469 = vpack.c.b16 %v453, %v453
      %v470 = vpack.c.b16 %v454, %v454
      %vm487 = vcmask 60416
      %488 = vst.msk [vmem:[%s204] sm:$0xf] %vm487, %v455
      %489 = vst.msk [vmem:[%s204 + $0x4] sm:$0xf] %vm487, %v456
      %490 = vst.msk [vmem:[%s204 + $0x8] sm:$0xf] %vm487, %v457
      %491 = vst.msk [vmem:[%s204 + $0xc] sm:$0xf] %vm487, %v458
      %492 = vst.msk [vmem:[%s204 + $0x10] sm:$0xf] %vm487, %v459
      %493 = vst.msk [vmem:[%s204 + $0x14] sm:$0xf] %vm487, %v460
      %494 = vst.msk [vmem:[%s204 + $0x18] sm:$0xf] %vm487, %v461
      %495 = vst.msk [vmem:[%s204 + $0x1c] sm:$0xf] %vm487, %v462
      %496 = vst.msk [vmem:[%s204 + $0x20] sm:$0xf] %vm487, %v463
      %497 = vst.msk [vmem:[%s204 + $0x24] sm:$0xf] %vm487, %v464
      %498 = vst.msk [vmem:[%s204 + $0x28] sm:$0xf] %vm487, %v465
      %499 = vst.msk [vmem:[%s204 + $0x2c] sm:$0xf] %vm487, %v466
      %500 = vst.msk [vmem:[%s204 + $0x30] sm:$0xf] %vm487, %v467
      %501 = vst.msk [vmem:[%s204 + $0x34] sm:$0xf] %vm487, %v468
      %502 = vst.msk [vmem:[%s204 + $0x38] sm:$0xf] %vm487, %v469
      %503 = vst.msk [vmem:[%s204 + $0x3c] sm:$0xf] %vm487, %v470
      %p504 = scmp.lt.s32.totalorder %s14, 1
      %s505 = scalar_select %p504, %s14, 1
      %s506 = smul.addr %s505, 16
      %s507 = smul.addr %s506, 4
      %s508 = scalar_lea.vmem %s3, %s507
      // Predicated region
      $region33: #{tpu_custom_call.1} parent=31 // pred_check
        %p509 = pneg %p110
      $region34: #{tpu_custom_call.1} parent=31 // pred_check_branch
        %511 = sbr.rel (%p509) target = $region36
      $region35: #{tpu_custom_call.1} parent=31 // pred_region
        _
      $region36: #{tpu_custom_call.1} parent=31 // pred_fallthru
        _
    $region32: #{tpu_custom_call.1} parent=5 // pred_fallthru
      _
    %p512 = scmp.le.s32.totalorder 2, %s9
    // Predicated region
    $region37: #{tpu_custom_call.1} parent=5 // pred_check
      %p513 = pneg %p512
    $region38: #{tpu_custom_call.1} parent=5 // pred_check_branch
      %515 = sbr.rel (%p513) target = $region40
    $region39: #{tpu_custom_call.1} parent=5 // pred_region
      %s516 = ssub.s32 %s9, 2
      // Predicated region
      $region41: #{tpu_custom_call.1} parent=39 // pred_check
        %p517 = pneg %p116
      $region42: #{tpu_custom_call.1} parent=39 // pred_check_branch
        %519 = sbr.rel (%p517) target = $region44
      $region43: #{tpu_custom_call.1} parent=39 // pred_region
        %p520 = scmp.lt.s32.totalorder %s15, 1
        %s521 = scalar_select %p520, %s15, 1
        %s522 = smul.addr %s521, 16
        %s523 = smul.addr %s522, 4
        %s524 = scalar_lea.vmem %s3, %s523
      $region44: #{tpu_custom_call.1} parent=39 // pred_fallthru
        _
    $region40: #{tpu_custom_call.1} parent=5 // pred_fallthru
      _
  $region6: #{tpu_custom_call.1} parent=0 // loop_footer
    %s13 = sadd.s32 1, %s9
  $region7: #{tpu_custom_call.1} parent=0 // loop_footer_branch
    %8 = sbr.rel target = $region3
  $region8: #{tpu_custom_call.1} parent=0 // loop_exit
    _

</llo_original>
